<compile_context>
chip_gen: v5e
topology: v5e:2x2
jax: 0.10.0
libtpu: 0.0.40
codegen_flags: <defaults>
</compile_context>

<pallas_src>
import functools
import math

import jax
import jax.numpy as jnp
from jax.experimental import pallas as pl
from jax.experimental.pallas import tpu as pltpu


def attention_block_kernel(x_ref, w_ref, b_ref, o_ref, *,
                           inv_sqrt_key_size, block_b, seq_len,
                           key_size, value_size, compute_dtype, approx_recip):
    Bb, T, K, V = block_b, seq_len, key_size, value_size

    # Fused QKV projection: one MXU pass on (Bb*T, C) @ (C, 2K+V).
    # x_ref is already 2-D (row-blocked in the wrapper): no in-kernel reshape.
    x = x_ref[...].astype(compute_dtype)
    w = w_ref[...].astype(compute_dtype)
    qkv = jnp.dot(x, w, preferred_element_type=jnp.float32) + b_ref[...]

    # Fold 1/sqrt(key_size) into q (cheaper than scaling the (T, T) scores;
    # -inf masked entries are unaffected, so numerically equivalent).
    q = (qkv[:, 0:K] * inv_sqrt_key_size).reshape(Bb, T, K).astype(compute_dtype)
    k = qkv[:, K:2 * K].reshape(Bb, T, K).astype(compute_dtype)
    v = qkv[:, 2 * K:].reshape(Bb, T, V).astype(compute_dtype)

    # scores[b, j, i] = <q[b, j], k[b, i]>  (== torch.bmm(query, keys^T)/sqrt(K))
    scores = jnp.einsum('bjk,bik->bji', q, k,
                        preferred_element_type=jnp.float32)      # (Bb, T, T) f32

    # mask[j, i] = 1 iff i > j  -> -inf before softmax (as in the PyTorch code).
    row = jax.lax.broadcasted_iota(jnp.int32, (T, T), 0)          # query index j
    col = jax.lax.broadcasted_iota(jnp.int32, (T, T), 1)          # key index i
    scores = jnp.where((col > row)[None, :, :], -jnp.inf, scores)

    # Softmax over the QUERY axis (torch dim=1) == axis 1 of (Bb, T, T), in f32.
    # Every key column keeps its diagonal entry unmasked -> no all -inf column.
    m = jnp.max(scores, axis=1, keepdims=True)                    # (Bb, 1, T)
    e = jnp.exp(scores - m)
    s = jnp.sum(e, axis=1, keepdims=True)                         # (Bb, 1, T)
    attn = e * pl.reciprocal(s, approx=approx_recip)              # EUP reciprocal

    # Lane-dense store: pack the batch into lanes -> (T, Bb*V) last-dim slab.
    out = jnp.einsum('bji,biv->jbv', attn.astype(compute_dtype), v,
                     preferred_element_type=jnp.float32)          # (T, Bb, V)
    o_ref[...] = out.reshape(1, T, Bb * V).astype(o_ref.dtype)


def _tensorcores_per_device():
    """Best-effort TensorCore count per device: 2 on megacore chips, else 1."""
    try:
        kind = jax.devices()[0].device_kind.lower()
    except Exception:
        return 1
    if "v7" in kind or "v4" in kind:
        return 2
    if "v5" in kind and "lite" not in kind and "v5e" not in kind:
        return 2  # v5p megacore
    return 1      # v5e / v6e: one TensorCore -> grid steps are a serial loop


def _choose_block_b(B, T, C, K, V, num_tc, vmem_budget_bytes=32 * 1024 * 1024):
    """Batch elements per grid step.

    Single-TC chips: whole batch in one step (extra steps are pure overhead).
    Megacore chips: exactly num_tc equal steps when the batch splits evenly.
    Always capped by a rough per-step VMEM estimate.
    """
    def fits(bb):
        x_tile = 2 * bb * T * C * 4                        # double-buffered input
        out_tile = 2 * T * bb * V * 4                      # double-buffered output
        temps = bb * (2 * T * (2 * K + V) + 2 * T * T) * 4  # qkv, q/k/v, scores, exp
        w = 2 * C * (2 * K + V) * 4
        return x_tile + out_tile + temps + w < vmem_budget_bytes

    divisors = [d for d in range(1, B + 1) if B % d == 0]
    if num_tc >= 2 and B > 1 and B % num_tc == 0:
        target = B // num_tc
    else:
        target = B
    candidates = [d for d in divisors if d <= target and fits(d)]
    return max(candidates) if candidates else 1


def attention_block(x, wq, bq, wk, bk, wv, bv, *, key_size, precision="bf16"):
    B, T, C = x.shape
    K = wq.shape[1]
    V = wv.shape[1]

    # Fuse the three projections into one weight / bias (one DMA, one MXU pass).
    w_qkv = jnp.concatenate([wq, wk, wv], axis=1)    # (C, 2K + V)
    b_qkv = jnp.concatenate([bq, bk, bv], axis=1)    # (1, 2K + V)

    num_tc = _tensorcores_per_device()
    block_b = _choose_block_b(B, T, C, K, V, num_tc)
    num_steps = B // block_b

    # Row-major flatten outside the kernel: the QKV matmul sees a plain 2-D ref.
    x2d = x.reshape(B * T, C)

    use_bf16 = (precision == "bf16")
    kern = functools.partial(
        attention_block_kernel,
        inv_sqrt_key_size=1.0 / math.sqrt(key_size),
        block_b=block_b, seq_len=T, key_size=K, value_size=V,
        compute_dtype=jnp.bfloat16 if use_bf16 else jnp.float32,
        approx_recip=use_bf16)

    attn_ld = pl.pallas_call(
        kern,
        out_shape=jax.ShapeDtypeStruct((num_steps, T, block_b * V), x.dtype),
        grid=(num_steps,),
        in_specs=[
            pl.BlockSpec((block_b * T, C), lambda g: (g, 0)),      # x rows tile
            pl.BlockSpec((C, 2 * K + V), lambda g: (0, 0)),        # fused W (invariant)
            pl.BlockSpec((1, 2 * K + V), lambda g: (0, 0)),        # fused bias
        ],
        out_specs=pl.BlockSpec((1, T, block_b * V), lambda g: (g, 0, 0)),
        compiler_params=pltpu.CompilerParams(
            dimension_semantics=("parallel",)),
    )(x2d, w_qkv, b_qkv)

    # Un-pack the lane-dense (steps, T, block_b*V) slab back to (B, T, V):
    # cheap XLA layout plumbing outside the kernel.
    attn_out = (attn_ld.reshape(num_steps, T, block_b, V)
                       .transpose(0, 2, 1, 3)
                       .reshape(B, T, V))

    # Residual concat kept outside the kernel (lane-dense kernel stores only).
    return jnp.concatenate([x, attn_out], axis=-1)


def reference(x, wq, bq, wk, bk, wv, bv, *, key_size):
    q = x @ wq + bq
    k = x @ wk + bk
    v = x @ wv + bv
    scores = jnp.einsum('btk,bsk->bts', q, k)
    T = x.shape[1]
    row = jnp.arange(T)[:, None]
    col = jnp.arange(T)[None, :]
    scores = jnp.where(col > row, -jnp.inf, scores)
    scores = scores / math.sqrt(key_size)
    attn = jax.nn.softmax(scores, axis=1)   # torch dim=1 (query axis)
    out = jnp.einsum('bts,bsv->btv', attn, v)
    return jnp.concatenate([x, out], axis=-1)


if __name__ == "__main__":
    B, T, C = 2, 8, 32          # batch, seq, in_channels
    key_size, value_size = 16, 16

    key = jax.random.PRNGKey(0)
    kx, kq, kbq, kk, kbk, kv, kbv = jax.random.split(key, 7)

    x = jax.random.normal(kx, (B, T, C), dtype=jnp.float32)

    # nn.Linear-style init: U(-1/sqrt(in), 1/sqrt(in)); weights stored (in, out).
    bound = 1.0 / math.sqrt(C)
    wq = jax.random.uniform(kq, (C, key_size), jnp.float32, -bound, bound)
    bq = jax.random.uniform(kbq, (1, key_size), jnp.float32, -bound, bound)
    wk = jax.random.uniform(kk, (C, key_size), jnp.float32, -bound, bound)
    bk = jax.random.uniform(kbk, (1, key_size), jnp.float32, -bound, bound)
    wv = jax.random.uniform(kv, (C, value_size), jnp.float32, -bound, bound)
    bv = jax.random.uniform(kbv, (1, value_size), jnp.float32, -bound, bound)

    ref = reference(x, wq, bq, wk, bk, wv, bv, key_size=key_size)

    # Production path: bf16 MXU operands, f32 accumulation, approx reciprocal.
    out = attention_block(x, wq, bq, wk, bk, wv, bv,
                          key_size=key_size, precision="bf16")
    out = jax.block_until_ready(out)
    assert out.shape == (B, T, C + value_size)
    assert jnp.allclose(out, ref, atol=2e-2, rtol=2e-2), "bf16 path mismatch"

    # Exact path: f32 MXU operands + exact reciprocal, tight tolerance, to
    # prove the kernel's semantics match the PyTorch module.
    out_f32 = jax.block_until_ready(
        attention_block(x, wq, bq, wk, bk, wv, bv,
                        key_size=key_size, precision="f32"))
    assert jnp.allclose(out_f32, ref, atol=1e-5, rtol=1e-5), "f32 path mismatch"

    print("KERNEL_OK")
</pallas_src>

<mosaic_0001>
module attributes {stable_mosaic.version = 11 : i64} {
  func.func @attention_block_kernel(%arg0: i32, %arg1: memref<16x32xf32, #tpu.memory_space<vmem>>, %arg2: memref<32x48xf32, #tpu.memory_space<vmem>>, %arg3: memref<1x48xf32, #tpu.memory_space<vmem>>, %arg4: memref<1x8x32xf32, #tpu.memory_space<vmem>>) attributes {dimension_semantics = [#tpu.dimension_semantics<parallel>], iteration_bounds = array<i64: 1>, scalar_prefetch = 0 : i64, scratch_operands = 0 : i64, tpu.core_type = #tpu.core_type<tc>, window_params = [{transform_indices = @transform_0, window_bounds = array<i64: 16, 32>}, {pipeline_mode = #tpu.pipeline_mode<synchronous>, transform_indices = @transform_1, window_bounds = array<i64: 32, 48>}, {pipeline_mode = #tpu.pipeline_mode<synchronous>, transform_indices = @transform_2, window_bounds = array<i64: 1, 48>}, {transform_indices = @transform_3, window_bounds = array<i64: 1, 8, 32>}]} {
    %c0 = arith.constant 0 : index
    %c0_0 = arith.constant 0 : index
    %0 = vector.load %arg1[%c0, %c0_0] : memref<16x32xf32, #tpu.memory_space<vmem>>, vector<16x32xf32>
    %1 = arith.truncf %0 : vector<16x32xf32> to vector<16x32xbf16>
    %c0_1 = arith.constant 0 : index
    %c0_2 = arith.constant 0 : index
    %2 = vector.load %arg2[%c0_1, %c0_2] : memref<32x48xf32, #tpu.memory_space<vmem>>, vector<32x48xf32>
    %3 = arith.truncf %2 : vector<32x48xf32> to vector<32x48xbf16>
    %cst = arith.constant dense<0.000000e+00> : vector<16x48xf32>
    %4 = tpu.matmul %1, %3, %cst {dimension_numbers = #tpu.dot_dimension_numbers<[1], [0], [0], [1], [0, 0, 1, 1], [], []>} : vector<16x32xbf16>, vector<32x48xbf16>, vector<16x48xf32> -> vector<16x48xf32>
    %c0_3 = arith.constant 0 : index
    %c0_4 = arith.constant 0 : index
    %5 = vector.load %arg3[%c0_3, %c0_4] : memref<1x48xf32, #tpu.memory_space<vmem>>, vector<1x48xf32>
    %6 = vector.broadcast %5 : vector<1x48xf32> to vector<16x48xf32>
    %7 = arith.addf %4, %6 : vector<16x48xf32>
    %8 = vector.extract_strided_slice %7 {offsets = [0, 0], sizes = [16, 16], strides = [1, 1]} : vector<16x48xf32> to vector<16x16xf32>
    %cst_5 = arith.constant 2.500000e-01 : f32
    %9 = vector.broadcast %cst_5 : f32 to vector<16x16xf32>
    %10 = arith.mulf %8, %9 : vector<16x16xf32>
    %11 = vector.shape_cast %10 : vector<16x16xf32> to vector<2x8x16xf32>
    %12 = arith.truncf %11 : vector<2x8x16xf32> to vector<2x8x16xbf16>
    %13 = vector.extract_strided_slice %7 {offsets = [0, 16], sizes = [16, 16], strides = [1, 1]} : vector<16x48xf32> to vector<16x16xf32>
    %14 = vector.shape_cast %13 : vector<16x16xf32> to vector<2x8x16xf32>
    %15 = arith.truncf %14 : vector<2x8x16xf32> to vector<2x8x16xbf16>
    %16 = vector.extract_strided_slice %7 {offsets = [0, 32], sizes = [16, 16], strides = [1, 1]} : vector<16x48xf32> to vector<16x16xf32>
    %17 = vector.shape_cast %16 : vector<16x16xf32> to vector<2x8x16xf32>
    %18 = arith.truncf %17 : vector<2x8x16xf32> to vector<2x8x16xbf16>
    "tpu.trace_start"() <{level = 10 : i32, message = "bjk,bik->bji"}> : () -> ()
    %cst_6 = arith.constant dense<0.000000e+00> : vector<2x8x8xf32>
    %19 = tpu.matmul %12, %15, %cst_6 {dimension_numbers = #tpu.dot_dimension_numbers<[2], [2], [1], [1], [0, 0, 0, 1, 1, 1], [0], [0]>} : vector<2x8x16xbf16>, vector<2x8x16xbf16>, vector<2x8x8xf32> -> vector<2x8x8xf32>
    "tpu.trace_stop"() : () -> ()
    %20 = tpu.iota {dimensions = array<i32: 0>} : vector<8x8xi32>
    %21 = tpu.iota {dimensions = array<i32: 1>} : vector<8x8xi32>
    %22 = arith.cmpi sgt, %21, %20 : vector<8x8xi32>
    %23 = vector.shape_cast %22 : vector<8x8xi1> to vector<1x8x8xi1>
    %cst_7 = arith.constant 0xFF800000 : f32
    %24 = vector.shape_cast %23 : vector<1x8x8xi1> to vector<1x8x8xi1>
    %25 = vector.broadcast %24 : vector<1x8x8xi1> to vector<2x8x8xi1>
    %26 = vector.broadcast %cst_7 : f32 to vector<2x8x8xf32>
    %27 = arith.select %25, %26, %19 : vector<2x8x8xi1>, vector<2x8x8xf32>
    %cst_8 = arith.constant dense<0xFF800000> : vector<2x8xf32>
    %28 = vector.multi_reduction <maximumf>, %27, %cst_8 [1] : vector<2x8x8xf32> to vector<2x8xf32>
    %29 = vector.shape_cast %28 : vector<2x8xf32> to vector<2x1x8xf32>
    %30 = vector.broadcast %29 : vector<2x1x8xf32> to vector<2x8x8xf32>
    %31 = arith.subf %27, %30 : vector<2x8x8xf32>
    %32 = math.exp %31 : vector<2x8x8xf32>
    %cst_9 = arith.constant dense<0.000000e+00> : vector<2x8xf32>
    %33 = vector.multi_reduction <add>, %32, %cst_9 [1] : vector<2x8x8xf32> to vector<2x8xf32>
    %34 = vector.shape_cast %33 : vector<2x8xf32> to vector<2x1x8xf32>
    %35 = tpu.reciprocal %34 {approx = true} : vector<2x1x8xf32> -> vector<2x1x8xf32>
    %36 = vector.broadcast %35 : vector<2x1x8xf32> to vector<2x8x8xf32>
    %37 = arith.mulf %32, %36 : vector<2x8x8xf32>
    %38 = arith.truncf %37 : vector<2x8x8xf32> to vector<2x8x8xbf16>
    "tpu.trace_start"() <{level = 10 : i32, message = "bji,biv->jbv"}> : () -> ()
    %cst_10 = arith.constant dense<0.000000e+00> : vector<2x16x8xf32>
    %39 = tpu.matmul %18, %38, %cst_10 {dimension_numbers = #tpu.dot_dimension_numbers<[1], [2], [2], [1], [0, 0, 0, 2, 1, 1], [0], [0]>} : vector<2x8x16xbf16>, vector<2x8x8xbf16>, vector<2x16x8xf32> -> vector<2x16x8xf32>
    %40 = tpu.transpose %39, [2, 0, 1] : vector<2x16x8xf32> -> vector<8x2x16xf32>
    "tpu.trace_stop"() : () -> ()
    %41 = vector.shape_cast %40 : vector<8x2x16xf32> to vector<1x8x32xf32>
    %c0_11 = arith.constant 0 : index
    %c0_12 = arith.constant 0 : index
    %c0_13 = arith.constant 0 : index
    %42 = vector.load %arg4[%c0_11, %c0_12, %c0_13] : memref<1x8x32xf32, #tpu.memory_space<vmem>>, vector<1x8x32xf32>
    tpu.vector_store %arg4[%c0_11, %c0_12, %c0_13], %41 {strides = array<i32>} : memref<1x8x32xf32, #tpu.memory_space<vmem>>, vector<1x8x32xf32>,
    return
  }
  func.func @transform_0(%arg0: i32) -> (i32, i32) {
    %c0_i32 = arith.constant 0 : i32
    %c0_i32_0 = arith.constant 0 : i32
    return %arg0, %c0_i32 : i32, i32
  }
  func.func @transform_1(%arg0: i32) -> (i32, i32) {
    %c0_i32 = arith.constant 0 : i32
    %c0_i32_0 = arith.constant 0 : i32
    %c0_i32_1 = arith.constant 0 : i32
    return %c0_i32, %c0_i32_0 : i32, i32
  }
  func.func @transform_2(%arg0: i32) -> (i32, i32) {
    %c0_i32 = arith.constant 0 : i32
    %c0_i32_0 = arith.constant 0 : i32
    %c0_i32_1 = arith.constant 0 : i32
    return %c0_i32, %c0_i32_0 : i32, i32
  }
  func.func @transform_3(%arg0: i32) -> (i32, i32, i32) {
    %c0_i32 = arith.constant 0 : i32
    %c0_i32_0 = arith.constant 0 : i32
    %c0_i32_1 = arith.constant 0 : i32
    return %arg0, %c0_i32, %c0_i32_0 : i32, i32, i32
  }
}

</mosaic_0001>

<llo_original>
// kernel: tpu_custom_call.1
$region0: #{tpu_custom_call.1}
  #allocation0 [shape = 'u32[]', space=smem, size = 0x4, offset = 0x4, fixed_abs, tag = 'smem constant byte address 0x4 - core index']
  #allocation1 [shape = 'u32[72,128]{1,0:T(1,128)}', space=vmem, size = 0x9000, scoped, tag = 'internal scratch']
  %s0 = inlined_call_operand.hbm [shape: f32[16,32], index: 0, kind: input, shape index: {}]
  %s1 = inlined_call_operand.hbm [shape: f32[32,48], index: 1, kind: input, shape index: {}]
  %s2 = inlined_call_operand.vmem [shape: f32[1,48], index: 2, kind: input, shape index: {}]
  %s3 = inlined_call_operand.hbm [shape: f32[1,8,32], index: 3, kind: output, shape index: {}]
  %s4 = sld [smem:[#allocation0]]
  $region30: #{tpu_custom_call.1} parent=0
    _
  %s6 = ssub.s32 1, %s4
  %s7 = scalar_select 0, %s6, %s4
  $region1: #{tpu_custom_call.1} parent=0
    #allocation2 [shape = 'u8[8192]{0}', space=vmem, size = 0x2000, scoped, tag = 'input window, operand 0, single buffered']
    #allocation3 [shape = 's32[1]{0}', space=sflag, size = 0x4, scoped, tag = 'scoped memory for tpu_custom_call.1']
    #allocation4 [shape = 's32[1]{0}', space=sflag, size = 0x4, scoped, tag = 'scoped memory for tpu_custom_call.1']
    #allocation5 [shape = 'u8[16384]{0}', space=vmem, size = 0x4000, scoped, tag = 'input window, operand 1, single buffered']
    #allocation6 [shape = 's32[1]{0}', space=sflag, size = 0x4, scoped, tag = 'scoped memory for tpu_custom_call.1']
    #allocation7 [shape = 'u8[4096]{0}', space=vmem, size = 0x1000, scoped, tag = 'output window, operand 0, single buffered']
    %8 = vsyncpa [#allocation3], 0
    %9 = vsyncpa [#allocation6], 0
    %10 = vsyncpa [#allocation4], 0
    // Predicated region
    $region2: #{tpu_custom_call.1} parent=1 // pred_check
      _
    $region3: #{tpu_custom_call.1} parent=1 // pred_check_branch
      %12 = sbr.rel (0) target = $region5
    $region4: #{tpu_custom_call.1} parent=1 // pred_region
      %14 = vsyncadd [#allocation3], 0
      %s15 = sshll.u32 %s0, 4
      %s16 = int_to_ptr.hbm [resolvable:$true] %s15
      %s17 = sshll.u32 [#allocation2], 4
      %s18 = int_to_ptr.vmem [resolvable:$true] %s17
      %23 = dma.hbm_to_vmem [thread:$0]  %s16, 256, %s18, [#allocation3], 128, 128, 8
    $region5: #{tpu_custom_call.1} parent=1 // pred_fallthru
      _
    // Predicated region
    $region6: #{tpu_custom_call.1} parent=1 // pred_check
      _
    $region7: #{tpu_custom_call.1} parent=1 // pred_check_branch
      %25 = sbr.rel (0) target = $region9
    $region8: #{tpu_custom_call.1} parent=1 // pred_region
      %27 = vsyncadd [#allocation6], 0
      %s28 = sshll.u32 %s1, 4
      %s29 = int_to_ptr.hbm [resolvable:$true] %s28
      %s30 = sshll.u32 [#allocation5], 4
      %s31 = int_to_ptr.vmem [resolvable:$true] %s30
      %36 = dma.hbm_to_vmem [thread:$0]  %s29, 512, %s31, [#allocation6], 128, 128, 8
    $region9: #{tpu_custom_call.1} parent=1 // pred_fallthru
      _
    // Predicated region
    $region10: #{tpu_custom_call.1} parent=1 // pred_check
      _
    $region11: #{tpu_custom_call.1} parent=1 // pred_check_branch
      %38 = sbr.rel (0) target = $region13
    $region12: #{tpu_custom_call.1} parent=1 // pred_region
      _
    $region13: #{tpu_custom_call.1} parent=1 // pred_fallthru
      _
    // Predicated region
    $region14: #{tpu_custom_call.1} parent=1 // pred_check
      _
    $region15: #{tpu_custom_call.1} parent=1 // pred_check_branch
      %40 = sbr.rel (0) target = $region17
    $region16: #{tpu_custom_call.1} parent=1 // pred_region
      %42 = dma.done [#allocation3], 256
    $region17: #{tpu_custom_call.1} parent=1 // pred_fallthru
      _
    // Predicated region
    $region18: #{tpu_custom_call.1} parent=1 // pred_check
      _
    $region19: #{tpu_custom_call.1} parent=1 // pred_check_branch
      %44 = sbr.rel (0) target = $region21
    $region20: #{tpu_custom_call.1} parent=1 // pred_region
      %46 = dma.done [#allocation6], 512
    $region21: #{tpu_custom_call.1} parent=1 // pred_fallthru
      _
    %v48 = vld [vmem:[#allocation2] sm:$0xff]
    %v49 = vld [vmem:[#allocation2 + $0x8] sm:$0xff]
    %v50 = vpack.c.bf16 %v49, %v48
    %v51 = vld [vmem:[#allocation5] sm:$0xff]
    %v52 = vld [vmem:[#allocation5 + $0x8] sm:$0xff]
    %v53 = vld [vmem:[#allocation5 + $0x10] sm:$0xff]
    %v54 = vld [vmem:[#allocation5 + $0x18] sm:$0xff]
    %v55 = vpack.c.bf16 %v52, %v51
    %v56 = vpack.c.bf16 %v54, %v53
    %v57 = vld [vmem:[%s2] sm:$0x1]
    %v59 = vperm.slane %v57, 0
    %vm61 = vcmask 261120
    %v63 = vsel %vm61, %v50, 0
    %65 = vmatpush.bf16.msra.mxu0 0
    %66 = vmatpush.bf16.msra.mxu0 0
    %67 = vmatpush.bf16.msra.mxu0 0
    %68 = vmatpush.bf16.msra.mxu0 0
    %69 = vmatpush.bf16.msra.mxu0 0
    %70 = vmatpush.bf16.msra.mxu0 0
    %71 = vmatpush.bf16.msra.mxu0 %v56
    %72 = vmatpush.bf16.msra.mxu0 %v55
    %73 = vmatmul.bf16.gmra.mxu0 %v63
    %v74 = vpop.f32.mrf.mxu0
    %v75 = vadd.f32 %v59, %v74
    %v76 = vpop.f32.mrf.mxu0
    %v77 = vadd.f32 %v59, %v76
    %78 = vdwg.mxu0
    %v79 = vmul.f32 %v75, 0.25
    %v80 = vmul.f32 %v77, 0.25
    %v81 = vpack.c.bf16 %v79, %v79
    %v82 = vpack.c.bf16 %v80, %v80
    %v83 = vpack.c.bf16 %v75, %v75
    %v84 = vpack.c.bf16 %v77, %v77
    %v86 = vunpack.c.l.b16 %v83
    %v87 = vpack.c.b16 %v86, %v86
    %88 = vrot.lane.b32.xlu0 %v87, 112
    %v89 = vpop.permute.xlu0 %88
    %vm90 = vcmask 130048
    %v92 = vsel %vm90, %v81, 0
    %v95 = vsel %vm90, %v89, 0
    %97 = vmatpush.bf16.xpose.msra.mxu0 0
    %98 = vmatpush.bf16.xpose.msra.mxu0 0
    %99 = vmatpush.bf16.xpose.msra.mxu0 0
    %100 = vmatpush.bf16.xpose.msra.mxu0 0
    %101 = vmatpush.bf16.xpose.msra.mxu0 0
    %102 = vmatpush.bf16.xpose.msra.mxu0 0
    %103 = vmatpush.bf16.xpose.msra.mxu0 0
    %104 = vmatpush.bf16.xpose.msra.mxu0 %v95
    %105 = vmatmul.bf16.gmra.mxu0 %v92
    %v106 = vpop.f32.mrf.mxu0
    %v107 = vadd.f32 0.0, %v106
    %v108 = vpop.f32.mrf.mxu0
    %109 = vdwg.mxu0
    %v111 = vunpack.c.l.b16 %v84
    %v112 = vpack.c.b16 %v111, %v111
    %113 = vrot.lane.b32.xlu0 %v112, 112
    %v114 = vpop.permute.xlu0 %113
    %v116 = vsel %vm90, %v82, 0
    %v119 = vsel %vm90, %v114, 0
    %121 = vmatpush.bf16.xpose.msra.mxu0 0
    %122 = vmatpush.bf16.xpose.msra.mxu0 0
    %123 = vmatpush.bf16.xpose.msra.mxu0 0
    %124 = vmatpush.bf16.xpose.msra.mxu0 0
    %125 = vmatpush.bf16.xpose.msra.mxu0 0
    %126 = vmatpush.bf16.xpose.msra.mxu0 0
    %127 = vmatpush.bf16.xpose.msra.mxu0 0
    %128 = vmatpush.bf16.xpose.msra.mxu0 %v119
    %129 = vmatmul.bf16.gmra.mxu0 %v116
    %v130 = vpop.f32.mrf.mxu0
    %v131 = vadd.f32 0.0, %v130
    %v132 = vpop.f32.mrf.mxu0
    %133 = vdwg.mxu0
    %v134 = vlaneseq
    %v135 = vshrl.u32 %v134, 7
    %v136 = vlaneseq
    %v137 = vand.u32 %v136, 127
    %vm138 = vcmp.gt.s32.totalorder %v137, %v135
    %v139 = vsel %vm138, 1, 0
    %vm140 = vcmp.eq.s32.totalorder %v139, 1
    %v141 = vsel %vm140, -inf, %v107
    %v142 = vsel %vm140, -inf, %v131
    %vm143 = vcmask 64512
    %v144 = vsel %vm143, %v141, -inf
    %v145 = vrot.slane %v144, 4
    %v146 = vmax.f32 %v144, %v145
    %v147 = vrot.slane %v146, 2
    %v148 = vmax.f32 %v146, %v147
    %v149 = vrot.slane %v148, 1
    %v150 = vmax.f32 %v148, %v149
    %v151 = vsel %vm143, %v142, -inf
    %v152 = vrot.slane %v151, 4
    %v153 = vmax.f32 %v151, %v152
    %v154 = vrot.slane %v153, 2
    %v155 = vmax.f32 %v153, %v154
    %v156 = vrot.slane %v155, 1
    %v157 = vmax.f32 %v155, %v156
    %v158 = vsub.f32 %v141, %v150
    %v159 = vsub.f32 %v142, %v157
    %v160 = vmul.f32 %v158, 1.442695
    %v161 = vpow.pop %v160
    %v162 = vmul.f32 %v159, 1.442695
    %v163 = vpow.pop %v162
    %v164 = vsel %vm143, %v161, 0.0
    %v165 = vrot.slane %v164, 4
    %v166 = vadd.f32 %v164, %v165
    %v167 = vrot.slane %v166, 2
    %v168 = vadd.f32 %v166, %v167
    %v169 = vrot.slane %v168, 1
    %v170 = vadd.f32 %v168, %v169
    %v171 = vsel %vm143, %v163, 0.0
    %v172 = vrot.slane %v171, 4
    %v173 = vadd.f32 %v171, %v172
    %v174 = vrot.slane %v173, 2
    %v175 = vadd.f32 %v173, %v174
    %v176 = vrot.slane %v175, 1
    %v177 = vadd.f32 %v175, %v176
    %v178 = vrcp.pop %v170
    %v179 = vrcp.pop %v177
    %v180 = vmul.f32 %v161, %v178
    %v181 = vmul.f32 %v163, %v179
    %v182 = vpack.c.bf16 %v180, %v180
    %v183 = vpack.c.bf16 %v181, %v181
    %184 = vrot.lane.b32.xlu0 %v87, 96
    %v185 = vpop.permute.xlu0 %184
    %187 = vxpose.xlu0.c.b16.start [1/8] %v185, 128
    %188 = vxpose.xlu0.c.b16.cont [2/8] 0, 128
    %189 = vxpose.xlu0.c.b16.cont [3/8] 0, 128
    %190 = vxpose.xlu0.c.b16.cont [4/8] 0, 128
    %191 = vxpose.xlu0.c.b16.cont [5/8] 0, 128
    %192 = vxpose.xlu0.c.b16.cont [6/8] 0, 128
    %193 = vxpose.xlu0.c.b16.cont [7/8] 0, 128
    %194 = vxpose.xlu0.c.b16.end [8/8] 0, 128
    %v195 = vpop.trf.xlu0
    %v196 = vpop.trf.xlu0
    %v197 = vpop.trf.xlu0
    %v198 = vpop.trf.xlu0
    %v199 = vpop.trf.xlu0
    %v200 = vpop.trf.xlu0
    %v201 = vpop.trf.xlu0
    %v202 = vpop.trf.xlu0
    %v204 = vsel %vm143, %v195, 0
    %v207 = vsel %vm143, %v182, 0
    %209 = vmatpush.bf16.xpose.msra.mxu0 0
    %210 = vmatpush.bf16.xpose.msra.mxu0 0
    %211 = vmatpush.bf16.xpose.msra.mxu0 0
    %212 = vmatpush.bf16.xpose.msra.mxu0 0
    %213 = vmatpush.bf16.xpose.msra.mxu0 0
    %214 = vmatpush.bf16.xpose.msra.mxu0 0
    %215 = vmatpush.bf16.xpose.msra.mxu0 0
    %216 = vmatpush.bf16.xpose.msra.mxu0 %v207
    %217 = vmatmul.bf16.gmra.mxu0 %v204
    %v218 = vpop.f32.mrf.mxu0
    %v219 = vadd.f32 0.0, %v218
    %v220 = vpop.f32.mrf.mxu0
    %v221 = vadd.f32 0.0, %v220
    %222 = vdwg.mxu0
    %223 = vrot.lane.b32.xlu0 %v112, 96
    %v224 = vpop.permute.xlu0 %223
    %226 = vxpose.xlu0.c.b16.start [1/8] %v224, 128
    %227 = vxpose.xlu0.c.b16.cont [2/8] 0, 128
    %228 = vxpose.xlu0.c.b16.cont [3/8] 0, 128
    %229 = vxpose.xlu0.c.b16.cont [4/8] 0, 128
    %230 = vxpose.xlu0.c.b16.cont [5/8] 0, 128
    %231 = vxpose.xlu0.c.b16.cont [6/8] 0, 128
    %232 = vxpose.xlu0.c.b16.cont [7/8] 0, 128
    %233 = vxpose.xlu0.c.b16.end [8/8] 0, 128
    %v234 = vpop.trf.xlu0
    %v235 = vpop.trf.xlu0
    %v236 = vpop.trf.xlu0
    %v237 = vpop.trf.xlu0
    %v238 = vpop.trf.xlu0
    %v239 = vpop.trf.xlu0
    %v240 = vpop.trf.xlu0
    %v241 = vpop.trf.xlu0
    %v243 = vsel %vm143, %v234, 0
    %v246 = vsel %vm143, %v183, 0
    %248 = vmatpush.bf16.xpose.msra.mxu0 0
    %249 = vmatpush.bf16.xpose.msra.mxu0 0
    %250 = vmatpush.bf16.xpose.msra.mxu0 0
    %251 = vmatpush.bf16.xpose.msra.mxu0 0
    %252 = vmatpush.bf16.xpose.msra.mxu0 0
    %253 = vmatpush.bf16.xpose.msra.mxu0 0
    %254 = vmatpush.bf16.xpose.msra.mxu0 0
    %255 = vmatpush.bf16.xpose.msra.mxu0 %v246
    %256 = vmatmul.bf16.gmra.mxu0 %v243
    %v257 = vpop.f32.mrf.mxu0
    %v258 = vadd.f32 0.0, %v257
    %v259 = vpop.f32.mrf.mxu0
    %v260 = vadd.f32 0.0, %v259
    %261 = vdwg.mxu0
    %262 = vxpose.xlu0.b32.start [1/16] %v219, 128
    %263 = vxpose.xlu0.b32.cont [2/16] %v221, 128
    %264 = vxpose.xlu0.b32.cont [3/16] 0.0, 128
    %265 = vxpose.xlu0.b32.cont [4/16] 0.0, 128
    %266 = vxpose.xlu0.b32.cont [5/16] 0.0, 128
    %267 = vxpose.xlu0.b32.cont [6/16] 0.0, 128
    %268 = vxpose.xlu0.b32.cont [7/16] 0.0, 128
    %269 = vxpose.xlu0.b32.cont [8/16] 0.0, 128
    %270 = vxpose.xlu0.b32.cont [9/16] 0.0, 128
    %271 = vxpose.xlu0.b32.cont [10/16] 0.0, 128
    %272 = vxpose.xlu0.b32.cont [11/16] 0.0, 128
    %273 = vxpose.xlu0.b32.cont [12/16] 0.0, 128
    %274 = vxpose.xlu0.b32.cont [13/16] 0.0, 128
    %275 = vxpose.xlu0.b32.cont [14/16] 0.0, 128
    %276 = vxpose.xlu0.b32.cont [15/16] 0.0, 128
    %277 = vxpose.xlu0.b32.end [16/16] 0.0, 128
    %v278 = vpop.trf.xlu0
    %v279 = vpop.trf.xlu0
    %v280 = vpop.trf.xlu0
    %v281 = vpop.trf.xlu0
    %v282 = vpop.trf.xlu0
    %v283 = vpop.trf.xlu0
    %v284 = vpop.trf.xlu0
    %v285 = vpop.trf.xlu0
    %v286 = vpop.trf.xlu0
    %v287 = vpop.trf.xlu0
    %v288 = vpop.trf.xlu0
    %v289 = vpop.trf.xlu0
    %v290 = vpop.trf.xlu0
    %v291 = vpop.trf.xlu0
    %v292 = vpop.trf.xlu0
    %v293 = vpop.trf.xlu0
    %294 = vxpose.xlu0.b32.start [1/16] %v258, 128
    %295 = vxpose.xlu0.b32.cont [2/16] %v260, 128
    %296 = vxpose.xlu0.b32.cont [3/16] 0.0, 128
    %297 = vxpose.xlu0.b32.cont [4/16] 0.0, 128
    %298 = vxpose.xlu0.b32.cont [5/16] 0.0, 128
    %299 = vxpose.xlu0.b32.cont [6/16] 0.0, 128
    %300 = vxpose.xlu0.b32.cont [7/16] 0.0, 128
    %301 = vxpose.xlu0.b32.cont [8/16] 0.0, 128
    %302 = vxpose.xlu0.b32.cont [9/16] 0.0, 128
    %303 = vxpose.xlu0.b32.cont [10/16] 0.0, 128
    %304 = vxpose.xlu0.b32.cont [11/16] 0.0, 128
    %305 = vxpose.xlu0.b32.cont [12/16] 0.0, 128
    %306 = vxpose.xlu0.b32.cont [13/16] 0.0, 128
    %307 = vxpose.xlu0.b32.cont [14/16] 0.0, 128
    %308 = vxpose.xlu0.b32.cont [15/16] 0.0, 128
    %309 = vxpose.xlu0.b32.end [16/16] 0.0, 128
    %v310 = vpop.trf.xlu0
    %v311 = vpop.trf.xlu0
    %v312 = vpop.trf.xlu0
    %v313 = vpop.trf.xlu0
    %v314 = vpop.trf.xlu0
    %v315 = vpop.trf.xlu0
    %v316 = vpop.trf.xlu0
    %v317 = vpop.trf.xlu0
    %v318 = vpop.trf.xlu0
    %v319 = vpop.trf.xlu0
    %v320 = vpop.trf.xlu0
    %v321 = vpop.trf.xlu0
    %v322 = vpop.trf.xlu0
    %v323 = vpop.trf.xlu0
    %v324 = vpop.trf.xlu0
    %v325 = vpop.trf.xlu0
    %v326 = vrot.slane %v278, 4
    %vm327 = vcmask 1047556
    %v328 = vsel %vm327, 0.0, %v326
    %v330 = vunpack.c.l.s4 1983009808
    %v331 = vunpack.c.0.s8 %v330
    %v332 = vperm.slane %v278, %v331
    %v334 = vunpack.c.l.s4 1983009808
    %v335 = vunpack.c.0.s8 %v334
    %v336 = vperm.slane %v328, %v335
    %v337 = vrot.slane %v310, 4
    %v338 = vsel %vm327, 0.0, %v337
    %v340 = vunpack.c.l.s4 1983009808
    %v341 = vunpack.c.0.s8 %v340
    %v342 = vperm.slane %v310, %v341
    %v344 = vunpack.c.l.s4 1983009808
    %v345 = vunpack.c.0.s8 %v344
    %v346 = vperm.slane %v338, %v345
    %v347 = vrot.slane %v342, 4
    %v348 = vsel %vm327, %v347, %v332
    %v349 = vrot.slane %v332, 4
    %v350 = vsel %vm327, %v342, %v349
    %v352 = vunpack.c.l.s4 1934713408
    %v353 = vunpack.c.0.s8 %v352
    %v354 = vperm.slane %v348, %v353
    %v356 = vunpack.c.l.s4 1934713408
    %v357 = vunpack.c.0.s8 %v356
    %v358 = vperm.slane %v350, %v357
    %v359 = vrot.slane %v346, 4
    %v360 = vsel %vm327, %v359, %v336
    %v361 = vrot.slane %v336, 4
    %v362 = vsel %vm327, %v346, %v361
    %v364 = vunpack.c.l.s4 1934713408
    %v365 = vunpack.c.0.s8 %v364
    %v366 = vperm.slane %v360, %v365
    %v368 = vunpack.c.l.s4 1934713408
    %v369 = vunpack.c.0.s8 %v368
    %v370 = vperm.slane %v362, %v369
    %v371 = vrot.slane %v354, 4
    %v372 = vsel %vm327, 0.0, %v371
    %v373 = vrot.slane %v358, 4
    %v374 = vsel %vm327, 0.0, %v373
    %v375 = vrot.slane %v366, 4
    %v376 = vsel %vm327, 0.0, %v375
    %v377 = vrot.slane %v370, 4
    %v378 = vsel %vm327, 0.0, %v377
    %v379 = vsel %vm327, %v373, %v354
    %v381 = vunpack.c.l.s4 1983009808
    %v382 = vunpack.c.0.s8 %v381
    %v383 = vperm.slane %v379, %v382
    %v384 = vrot.slane %v374, 4
    %v385 = vsel %vm327, %v384, %v372
    %v387 = vunpack.c.l.s4 1983009808
    %v388 = vunpack.c.0.s8 %v387
    %v389 = vperm.slane %v385, %v388
    %v390 = vsel %vm327, %v377, %v366
    %v392 = vunpack.c.l.s4 1983009808
    %v393 = vunpack.c.0.s8 %v392
    %v394 = vperm.slane %v390, %v393
    %v395 = vrot.slane %v378, 4
    %v396 = vsel %vm327, %v395, %v376
    %v398 = vunpack.c.l.s4 1983009808
    %v399 = vunpack.c.0.s8 %v398
    %v400 = vperm.slane %v396, %v399
    %v401 = vrot.slane %v389, 4
    %v402 = vsel %vm327, %v401, %v383
    %v404 = vunpack.c.l.s4 1934713408
    %v405 = vunpack.c.0.s8 %v404
    %v406 = vperm.slane %v402, %v405
    %v407 = vrot.slane %v400, 4
    %v408 = vsel %vm327, %v407, %v394
    %v410 = vunpack.c.l.s4 1934713408
    %v411 = vunpack.c.0.s8 %v410
    %v412 = vperm.slane %v408, %v411
    %v413 = vrot.slane %v412, 4
    %v414 = vsel %vm327, %v413, %v406
    %v415 = vrot.slane %v406, 4
    %v416 = vsel %vm327, %v412, %v415
    %418 = vrot.lane.b32.xlu0 %v416, 16
    %v419 = vpop.permute.xlu0 %418
    %v421 = vsel %vm90, %v414, %v419
    %422 = vst.msk [vmem:[#allocation7] sm:$0xff] %vm61, %v421
    // Predicated region
    $region22: #{tpu_custom_call.1} parent=1 // pred_check
      _
    $region23: #{tpu_custom_call.1} parent=1 // pred_check_branch
      %424 = sbr.rel (0) target = $region25
    $region24: #{tpu_custom_call.1} parent=1 // pred_region
      %426 = vsyncadd [#allocation4], 0
      %s428 = sshll.u32 [#allocation7], 4
      %s429 = int_to_ptr.vmem [resolvable:$true] %s428
      %s430 = sshll.u32 %s3, 4
      %s431 = int_to_ptr.hbm [resolvable:$true] %s430
      %433 = dma.vmem_to_hbm [thread:$0]  %s429, 128, %s431, [#allocation4]
    $region25: #{tpu_custom_call.1} parent=1 // pred_fallthru
      _
    // Predicated region
    $region26: #{tpu_custom_call.1} parent=1 // pred_check
      _
    $region27: #{tpu_custom_call.1} parent=1 // pred_check_branch
      %435 = sbr.rel (0) target = $region29
    $region28: #{tpu_custom_call.1} parent=1 // pred_region
      %437 = dma.done [#allocation4], 128
    $region29: #{tpu_custom_call.1} parent=1 // pred_fallthru
      _
    %438 = vsyncpa [#allocation3], 1
    %439 = vsyncpa [#allocation6], 1
    %440 = vsyncpa [#allocation4], 1

</llo_original>
